<compile_context>
chip_gen: v6e
topology: v6e:2x2x1
jax: 0.10.0
libtpu: 0.0.40
codegen_flags: <defaults>
</compile_context>

<pallas_src>
import math

import jax
import jax.numpy as jnp
from jax.experimental import pallas as pl
from jax.experimental.pallas import tpu as pltpu


def _bilinear_matrix(in_size: int) -> jnp.ndarray:
    """(2*in_size, in_size) matrix implementing PyTorch bilinear upsample x2,
    align_corners=False (half-pixel, src clamped to >= 0, index clamped)."""
    out_size = 2 * in_size
    dst = jnp.arange(out_size, dtype=jnp.float32)
    src = (dst + 0.5) / 2.0 - 0.5
    src = jnp.maximum(src, 0.0)
    i0 = jnp.clip(jnp.floor(src).astype(jnp.int32), 0, in_size - 1)
    i1 = jnp.clip(i0 + 1, 0, in_size - 1)
    frac = src - jnp.floor(src)
    rows = jnp.arange(out_size)
    A = jnp.zeros((out_size, in_size), dtype=jnp.float32)
    A = A.at[rows, i0].add(1.0 - frac)
    A = A.at[rows, i1].add(frac)
    return A


def _pack_factor(nc: int, w: int) -> int:
    """How many planes to pack along the lane axis so p*w % 128 == 0."""
    if w >= 128:
        return 1
    p = 128 // math.gcd(128, w)   # power of two
    while p > 1 and nc % p != 0:
        p //= 2
    return p


def _batch_factor(g: int, h: int, per_group_bytes: int,
                  budget: int = 4 * 1024 * 1024, max_rows: int = 512) -> int:
    """Largest divisor B of g s.t. the in+out block stays under `budget` bytes
    and B*h (matmul M / unroll count) stays bounded."""
    best = 1
    for b in range(1, g + 1):
        if g % b != 0:
            continue
        if b * per_group_bytes > budget or b * h > max_rows:
            break
        best = b
    return best


def _vmem_limit_bytes() -> int:
    default = 48 * 1024 * 1024
    try:
        cap = int(pltpu.get_tpu_info().vmem_capacity_bytes)
        return max(default, min((cap * 3) // 4, 96 * 1024 * 1024))
    except Exception:
        return default


def _upsample_kernel(ah_ref, awt_ref, x_ref, o_ref):
    # ah_ref:  (2H, H)          height-interp weights
    # awt_ref: (P*W, P*2W)      block-diagonal width-interp weights (kron(I_P, Aw^T))
    # x_ref:   (B, H, P*W)      B packed plane-groups
    # o_ref:   (B, 2H, P*2W)
    B, H, PW = x_ref.shape
    P2W = awt_ref.shape[1]

    ah = ah_ref[...]
    awt = awt_ref[...]

    # W-pass: one big MXU matmul with the batch folded into M.
    x2d = x_ref[...].reshape(B * H, PW)
    tmp2d = jnp.dot(x2d, awt, preferred_element_type=jnp.float32)   # (B*H, P*2W)

    # H-pass: unrolled over the (small) in-block batch; lane-dense N = P*2W.
    for b in range(B):
        tmp_b = tmp2d[b * H:(b + 1) * H, :]                          # (H, P*2W)
        out_b = jnp.dot(ah, tmp_b, preferred_element_type=jnp.float32)  # (2H, P*2W)
        o_ref[b] = out_b.astype(o_ref.dtype)


def upsample_bilinear_x2(x: jnp.ndarray) -> jnp.ndarray:
    """x: (N, C, H, W) float32 -> (N, C, 2H, 2W) bilinear upsample (PyTorch semantics)."""
    N, C, H, W = x.shape
    NC = N * C

    P = _pack_factor(NC, W)                 # planes packed along the lane axis
    G = NC // P                             # packed groups
    PW, P2W = P * W, 2 * P * W
    per_group_bytes = 4 * (H * PW + 2 * H * P2W)   # f32 in + out per group
    B = _batch_factor(G, H, per_group_bytes)       # groups per grid step

    Ah = _bilinear_matrix(H)                       # (2H, H)
    AwT = _bilinear_matrix(W).T                    # (W, 2W)
    AwT_bd = jnp.kron(jnp.eye(P, dtype=jnp.float32), AwT)   # (P*W, P*2W)

    # Pack P planes side-by-side along the last (lane) axis.
    xf = x.astype(jnp.float32).reshape(G, P, H, W)
    x_packed = jnp.transpose(xf, (0, 2, 1, 3)).reshape(G, H, PW)

    out_packed = pl.pallas_call(
        _upsample_kernel,
        out_shape=jax.ShapeDtypeStruct((G, 2 * H, P2W), jnp.float32),
        grid_spec=pltpu.PrefetchScalarGridSpec(
            num_scalar_prefetch=0,
            grid=(G // B,),
            in_specs=[
                pl.BlockSpec((2 * H, H), lambda i: (0, 0)),     # Ah, resident
                pl.BlockSpec((PW, P2W), lambda i: (0, 0)),      # kron(I_P, Aw^T), resident
                pl.BlockSpec((B, H, PW), lambda i: (i, 0, 0)),  # B packed groups / step
            ],
            out_specs=pl.BlockSpec((B, 2 * H, P2W), lambda i: (i, 0, 0)),
        ),
        compiler_params=pltpu.CompilerParams(
            dimension_semantics=("parallel",),
            vmem_limit_bytes=_vmem_limit_bytes()),
    )(Ah, AwT_bd, x_packed)

    # Unpack the lane-packed planes back to (N, C, 2H, 2W).
    out = out_packed.reshape(G, 2 * H, P, 2 * W)
    out = jnp.transpose(out, (0, 2, 1, 3)).reshape(N, C, 2 * H, 2 * W)
    return out


def _reference_upsample(x: jnp.ndarray) -> jnp.ndarray:
    """Pure-jnp gather-based reference matching PyTorch bilinear x2 (align_corners=False)."""
    N, C, H, W = x.shape

    def idx(dim):
        dst = jnp.arange(2 * dim, dtype=jnp.float32)
        src = jnp.maximum((dst + 0.5) / 2.0 - 0.5, 0.0)
        i0 = jnp.clip(jnp.floor(src).astype(jnp.int32), 0, dim - 1)
        i1 = jnp.clip(i0 + 1, 0, dim - 1)
        f = src - jnp.floor(src)
        return i0, i1, f

    h0, h1, fh = idx(H)
    w0, w1, fw = idx(W)
    xh = x[:, :, h0, :] * (1.0 - fh)[None, None, :, None] \
       + x[:, :, h1, :] * fh[None, None, :, None]
    out = xh[:, :, :, w0] * (1.0 - fw)[None, None, None, :] \
        + xh[:, :, :, w1] * fw[None, None, None, :]
    return out


if __name__ == "__main__":
    key = jax.random.PRNGKey(0)
    N, C, H, W = 2, 4, 16, 16          # dim=C, consistent with upsample(dim=4, ...)
    x = jax.random.normal(key, (N, C, H, W), dtype=jnp.float32)

    out = upsample_bilinear_x2(x)
    out = jax.block_until_ready(out)

    ref = _reference_upsample(x)
    assert out.shape == (N, C, 2 * H, 2 * W)
    assert jnp.allclose(out, ref, atol=1e-5, rtol=1e-5)

    print("KERNEL_OK")
</pallas_src>

<mosaic_0001>
module attributes {stable_mosaic.version = 11 : i64} {
  func.func @_upsample_kernel(%arg0: i32, %arg1: memref<32x16xf32, #tpu.memory_space<vmem>>, %arg2: memref<128x256xf32, #tpu.memory_space<vmem>>, %arg3: memref<1x16x128xf32, #tpu.memory_space<vmem>>, %arg4: memref<1x32x256xf32, #tpu.memory_space<vmem>>) attributes {dimension_semantics = [#tpu.dimension_semantics<parallel>], iteration_bounds = array<i64: 1>, scalar_prefetch = 0 : i64, scratch_operands = 0 : i64, tpu.core_type = #tpu.core_type<tc>, window_params = [{pipeline_mode = #tpu.pipeline_mode<synchronous>, transform_indices = @transform_0, window_bounds = array<i64: 32, 16>}, {pipeline_mode = #tpu.pipeline_mode<synchronous>, transform_indices = @transform_1, window_bounds = array<i64: 128, 256>}, {transform_indices = @transform_2, window_bounds = array<i64: 1, 16, 128>}, {transform_indices = @transform_3, window_bounds = array<i64: 1, 32, 256>}]} {
    %c0 = arith.constant 0 : index
    %c0_0 = arith.constant 0 : index
    %0 = vector.load %arg1[%c0, %c0_0] : memref<32x16xf32, #tpu.memory_space<vmem>>, vector<32x16xf32>
    %c0_1 = arith.constant 0 : index
    %c0_2 = arith.constant 0 : index
    %1 = vector.load %arg2[%c0_1, %c0_2] : memref<128x256xf32, #tpu.memory_space<vmem>>, vector<128x256xf32>
    %c0_3 = arith.constant 0 : index
    %c0_4 = arith.constant 0 : index
    %c0_5 = arith.constant 0 : index
    %2 = vector.load %arg3[%c0_3, %c0_4, %c0_5] : memref<1x16x128xf32, #tpu.memory_space<vmem>>, vector<1x16x128xf32>
    %3 = vector.shape_cast %2 : vector<1x16x128xf32> to vector<16x128xf32>
    %cst = arith.constant dense<0.000000e+00> : vector<16x256xf32>
    %4 = tpu.matmul %3, %1, %cst {dimension_numbers = #tpu.dot_dimension_numbers<[1], [0], [0], [1], [0, 0, 1, 1], [], []>} : vector<16x128xf32>, vector<128x256xf32>, vector<16x256xf32> -> vector<16x256xf32>
    %cst_6 = arith.constant dense<0.000000e+00> : vector<32x256xf32>
    %5 = tpu.matmul %0, %4, %cst_6 {dimension_numbers = #tpu.dot_dimension_numbers<[1], [0], [0], [1], [0, 0, 1, 1], [], []>} : vector<32x16xf32>, vector<16x256xf32>, vector<32x256xf32> -> vector<32x256xf32>
    %c0_7 = arith.constant 0 : index
    %c0_8 = arith.constant 0 : index
    %c0_9 = arith.constant 0 : index
    %6 = vector.load %arg4[%c0_7, %c0_8, %c0_9] : memref<1x32x256xf32, #tpu.memory_space<vmem>>, vector<1x32x256xf32>
    %7 = vector.shape_cast %6 : vector<1x32x256xf32> to vector<32x256xf32>
    %8 = vector.shape_cast %5 : vector<32x256xf32> to vector<1x32x256xf32>
    tpu.vector_store %arg4[%c0_7, %c0_8, %c0_9], %8 {strides = array<i32>} : memref<1x32x256xf32, #tpu.memory_space<vmem>>, vector<1x32x256xf32>,
    return
  }
  func.func @transform_0(%arg0: i32) -> (i32, i32) {
    %c0_i32 = arith.constant 0 : i32
    %c0_i32_0 = arith.constant 0 : i32
    %c0_i32_1 = arith.constant 0 : i32
    return %c0_i32, %c0_i32_0 : i32, i32
  }
  func.func @transform_1(%arg0: i32) -> (i32, i32) {
    %c0_i32 = arith.constant 0 : i32
    %c0_i32_0 = arith.constant 0 : i32
    %c0_i32_1 = arith.constant 0 : i32
    return %c0_i32, %c0_i32_0 : i32, i32
  }
  func.func @transform_2(%arg0: i32) -> (i32, i32, i32) {
    %c0_i32 = arith.constant 0 : i32
    %c0_i32_0 = arith.constant 0 : i32
    %c0_i32_1 = arith.constant 0 : i32
    return %arg0, %c0_i32, %c0_i32_0 : i32, i32, i32
  }
  func.func @transform_3(%arg0: i32) -> (i32, i32, i32) {
    %c0_i32 = arith.constant 0 : i32
    %c0_i32_0 = arith.constant 0 : i32
    %c0_i32_1 = arith.constant 0 : i32
    return %arg0, %c0_i32, %c0_i32_0 : i32, i32, i32
  }
}

</mosaic_0001>

<llo_original>
// kernel: tpu_custom_call.1
$region0: #{tpu_custom_call.1}
  #allocation0 [shape = 'u32[]', space=smem, size = 0x4, offset = 0x4, fixed_abs, tag = 'smem constant byte address 0x4 - core index']
  #allocation1 [shape = 'u32[144,128]{1,0:T(1,128)}', space=vmem, size = 0x12000, scoped, tag = 'internal scratch']
  %s0 = inlined_call_operand.vmem [shape: f32[32,16], index: 0, kind: input, shape index: {}]
  %s1 = inlined_call_operand.hbm [shape: f32[128,256], index: 1, kind: input, shape index: {}]
  %s2 = inlined_call_operand.vmem [shape: f32[1,16,128], index: 2, kind: input, shape index: {}]
  %s3 = inlined_call_operand.hbm [shape: f32[1,32,256], index: 3, kind: output, shape index: {}]
  %s4 = sld [smem:[#allocation0]]
  $region26: #{tpu_custom_call.1} parent=0
    _
  %s6 = ssub.s32 1, %s4
  %s7 = scalar_select 0, %s6, %s4
  $region1: #{tpu_custom_call.1} parent=0
    #allocation2 [shape = 'u8[131072]{0}', space=vmem, size = 0x20000, scoped, tag = 'input window, operand 1, single buffered']
    #allocation3 [shape = 's32[1]{0}', space=sflag, size = 0x4, scoped, tag = 'scoped memory for tpu_custom_call.1']
    #allocation4 [shape = 's32[1]{0}', space=sflag, size = 0x4, scoped, tag = 'scoped memory for tpu_custom_call.1']
    #allocation5 [shape = 'u8[32768]{0}', space=vmem, size = 0x8000, scoped, tag = 'output window, operand 0, single buffered']
    %8 = vsyncpa [#allocation3], 0
    %9 = vsyncpa [#allocation4], 0
    // Predicated region
    $region2: #{tpu_custom_call.1} parent=1 // pred_check
      _
    $region3: #{tpu_custom_call.1} parent=1 // pred_check_branch
      %11 = sbr.rel (0) target = $region5
    $region4: #{tpu_custom_call.1} parent=1 // pred_region
      _
    $region5: #{tpu_custom_call.1} parent=1 // pred_fallthru
      _
    // Predicated region
    $region6: #{tpu_custom_call.1} parent=1 // pred_check
      _
    $region7: #{tpu_custom_call.1} parent=1 // pred_check_branch
      %13 = sbr.rel (0) target = $region9
    $region8: #{tpu_custom_call.1} parent=1 // pred_region
      %s15 = ssub.s32 4096, 4096
      %16 = vsyncadd [#allocation3], %s15
      %s17 = sshll.u32 [#allocation2], 4
      %s18 = int_to_ptr.vmem [resolvable:$true] %s17
      %23 = dma.hbm_to_vmem [thread:$0]  %s1, 4096, %s18, [#allocation3], 256, 256, 16
    $region9: #{tpu_custom_call.1} parent=1 // pred_fallthru
      _
    // Predicated region
    $region10: #{tpu_custom_call.1} parent=1 // pred_check
      _
    $region11: #{tpu_custom_call.1} parent=1 // pred_check_branch
      %25 = sbr.rel (0) target = $region13
    $region12: #{tpu_custom_call.1} parent=1 // pred_region
      _
    $region13: #{tpu_custom_call.1} parent=1 // pred_fallthru
      _
    // Predicated region
    $region14: #{tpu_custom_call.1} parent=1 // pred_check
      _
    $region15: #{tpu_custom_call.1} parent=1 // pred_check_branch
      %27 = sbr.rel (0) target = $region17
    $region16: #{tpu_custom_call.1} parent=1 // pred_region
      %28 = dma.done [#allocation3], 4096
    $region17: #{tpu_custom_call.1} parent=1 // pred_fallthru
      _
    %v29 = vld [vmem:[%s0] sm:$0xff]
    %v30 = vld [vmem:[%s0 + $0x8] sm:$0xff]
    %v31 = vld [vmem:[%s0 + $0x10] sm:$0xff]
    %v32 = vld [vmem:[%s0 + $0x18] sm:$0xff]
    %v33 = vld [vmem:[#allocation2] sm:$0xff]
    %v34 = vld [vmem:[#allocation2 + $0x8] sm:$0xff]
    %v35 = vld [vmem:[#allocation2 + $0x10] sm:$0xff]
    %v36 = vld [vmem:[#allocation2 + $0x18] sm:$0xff]
    %v37 = vld [vmem:[#allocation2 + $0x20] sm:$0xff]
    %v38 = vld [vmem:[#allocation2 + $0x28] sm:$0xff]
    %v39 = vld [vmem:[#allocation2 + $0x30] sm:$0xff]
    %v40 = vld [vmem:[#allocation2 + $0x38] sm:$0xff]
    %v41 = vld [vmem:[#allocation2 + $0x40] sm:$0xff]
    %v42 = vld [vmem:[#allocation2 + $0x48] sm:$0xff]
    %v43 = vld [vmem:[#allocation2 + $0x50] sm:$0xff]
    %v44 = vld [vmem:[#allocation2 + $0x58] sm:$0xff]
    %v45 = vld [vmem:[#allocation2 + $0x60] sm:$0xff]
    %v46 = vld [vmem:[#allocation2 + $0x68] sm:$0xff]
    %v47 = vld [vmem:[#allocation2 + $0x70] sm:$0xff]
    %v48 = vld [vmem:[#allocation2 + $0x78] sm:$0xff]
    %v49 = vld [vmem:[#allocation2 + $0x80] sm:$0xff]
    %v50 = vld [vmem:[#allocation2 + $0x88] sm:$0xff]
    %v51 = vld [vmem:[#allocation2 + $0x90] sm:$0xff]
    %v52 = vld [vmem:[#allocation2 + $0x98] sm:$0xff]
    %v53 = vld [vmem:[#allocation2 + $0xa0] sm:$0xff]
    %v54 = vld [vmem:[#allocation2 + $0xa8] sm:$0xff]
    %v55 = vld [vmem:[#allocation2 + $0xb0] sm:$0xff]
    %v56 = vld [vmem:[#allocation2 + $0xb8] sm:$0xff]
    %v57 = vld [vmem:[#allocation2 + $0xc0] sm:$0xff]
    %v58 = vld [vmem:[#allocation2 + $0xc8] sm:$0xff]
    %v59 = vld [vmem:[#allocation2 + $0xd0] sm:$0xff]
    %v60 = vld [vmem:[#allocation2 + $0xd8] sm:$0xff]
    %v61 = vld [vmem:[#allocation2 + $0xe0] sm:$0xff]
    %v62 = vld [vmem:[#allocation2 + $0xe8] sm:$0xff]
    %v63 = vld [vmem:[#allocation2 + $0xf0] sm:$0xff]
    %v64 = vld [vmem:[#allocation2 + $0xf8] sm:$0xff]
    %v65 = vld [vmem:[%s2] sm:$0xff]
    %v66 = vld [vmem:[%s2 + $0x8] sm:$0xff]
    %67 = vmatprep.subr.mxu0 %v64
    %68 = vmatpush1.msra.mxu0 %v63
    %69 = vmatprep.subr.mxu0 %v62
    %70 = vmatpush1.msra.mxu0 %v61
    %71 = vmatprep.subr.mxu0 %v60
    %72 = vmatpush1.msra.mxu0 %v59
    %73 = vmatprep.subr.mxu0 %v58
    %74 = vmatpush1.msra.mxu0 %v57
    %75 = vmatprep.subr.mxu0 %v56
    %76 = vmatpush1.msra.mxu0 %v55
    %77 = vmatprep.subr.mxu0 %v54
    %78 = vmatpush1.msra.mxu0 %v53
    %79 = vmatprep.subr.mxu0 %v52
    %80 = vmatpush1.msra.mxu0 %v51
    %81 = vmatprep.subr.mxu0 %v50
    %82 = vmatpush1.msra.mxu0 %v49
    %83 = vmatprep.subr.mxu0 %v48
    %84 = vmatpush1.msra.mxu0 %v47
    %85 = vmatprep.subr.mxu0 %v46
    %86 = vmatpush1.msra.mxu0 %v45
    %87 = vmatprep.subr.mxu0 %v44
    %88 = vmatpush1.msra.mxu0 %v43
    %89 = vmatprep.subr.mxu0 %v42
    %90 = vmatpush1.msra.mxu0 %v41
    %91 = vmatprep.subr.mxu0 %v40
    %92 = vmatpush1.msra.mxu0 %v39
    %93 = vmatprep.subr.mxu0 %v38
    %94 = vmatpush1.msra.mxu0 %v37
    %95 = vmatprep.subr.mxu0 %v36
    %96 = vmatpush1.msra.mxu0 %v35
    %97 = vmatprep.subr.mxu0 %v34
    %98 = vmatpush1.msra.mxu0 %v33
    %99 = vmatprep.subr.mxu0 0.0
    %100 = vmatpush2.msra.mxu0 0.0
    %101 = vmatprep.subr.mxu0 0.0
    %102 = vmatpush2.msra.mxu0 0.0
    %103 = vmatprep.subr.mxu0 0.0
    %104 = vmatpush2.msra.mxu0 0.0
    %105 = vmatprep.subr.mxu0 0.0
    %106 = vmatpush2.msra.mxu0 0.0
    %107 = vmatprep.subr.mxu0 0.0
    %108 = vmatpush2.msra.mxu0 0.0
    %109 = vmatprep.subr.mxu0 0.0
    %110 = vmatpush2.msra.mxu0 0.0
    %111 = vmatprep.subr.mxu0 0.0
    %112 = vmatpush2.msra.mxu0 0.0
    %113 = vmatprep.subr.mxu0 0.0
    %114 = vmatpush2.msra.mxu0 0.0
    %115 = vmatprep.subr.mxu0 0.0
    %116 = vmatpush2.msra.mxu0 0.0
    %117 = vmatprep.subr.mxu0 0.0
    %118 = vmatpush2.msra.mxu0 0.0
    %119 = vmatprep.subr.mxu0 0.0
    %120 = vmatpush2.msra.mxu0 0.0
    %121 = vmatprep.subr.mxu0 0.0
    %122 = vmatpush2.msra.mxu0 0.0
    %123 = vmatprep.subr.mxu0 0.0
    %124 = vmatpush2.msra.mxu0 0.0
    %125 = vmatprep.subr.mxu0 0.0
    %126 = vmatpush2.msra.mxu0 0.0
    %127 = vmatprep.subr.mxu0 0.0
    %128 = vmatpush2.msra.mxu0 0.0
    %129 = vmatprep.subr.mxu0 0.0
    %130 = vmatpush2.msra.mxu0 0.0
    %131 = vmatprep.mubr.f32.mxu0 0.0
    %132 = vmatmul.mubr.f32.gmra.mxu0 %v65
    %v133 = vpop.f32.mrf.mxu0
    %v134 = vadd.f32 0.0, %v133
    %v135 = vpop.f32.mrf.mxu0
    %v136 = vadd.f32 0.0, %v135
    %137 = vmatprep.mubr.f32.mxu0 0.0
    %138 = vmatmul.mubr.f32.gmra.mxu0 %v66
    %v139 = vpop.f32.mrf.mxu0
    %v140 = vadd.f32 0.0, %v139
    %v141 = vpop.f32.mrf.mxu0
    %v142 = vadd.f32 0.0, %v141
    %143 = vdwg.mxu0
    %vm144 = vcmask 130048
    %v146 = vsel %vm144, %v29, 0
    %v149 = vsel %vm144, %v30, 0
    %v152 = vsel %vm144, %v31, 0
    %v155 = vsel %vm144, %v32, 0
    %157 = vmatprep.subr.mxu0 0.0
    %158 = vmatpush1.msra.mxu0 0.0
    %159 = vmatprep.subr.mxu0 0.0
    %160 = vmatpush1.msra.mxu0 0.0
    %161 = vmatprep.subr.mxu0 0.0
    %162 = vmatpush1.msra.mxu0 0.0
    %163 = vmatprep.subr.mxu0 0.0
    %164 = vmatpush1.msra.mxu0 0.0
    %165 = vmatprep.subr.mxu0 0.0
    %166 = vmatpush1.msra.mxu0 0.0
    %167 = vmatprep.subr.mxu0 0.0
    %168 = vmatpush1.msra.mxu0 0.0
    %169 = vmatprep.subr.mxu0 0.0
    %170 = vmatpush1.msra.mxu0 0.0
    %171 = vmatprep.subr.mxu0 0.0
    %172 = vmatpush1.msra.mxu0 0.0
    %173 = vmatprep.subr.mxu0 0.0
    %174 = vmatpush1.msra.mxu0 0.0
    %175 = vmatprep.subr.mxu0 0.0
    %176 = vmatpush1.msra.mxu0 0.0
    %177 = vmatprep.subr.mxu0 0.0
    %178 = vmatpush1.msra.mxu0 0.0
    %179 = vmatprep.subr.mxu0 0.0
    %180 = vmatpush1.msra.mxu0 0.0
    %181 = vmatprep.subr.mxu0 0.0
    %182 = vmatpush1.msra.mxu0 0.0
    %183 = vmatprep.subr.mxu0 0.0
    %184 = vmatpush1.msra.mxu0 0.0
    %185 = vmatprep.subr.mxu0 %v142
    %186 = vmatpush1.msra.mxu0 %v140
    %187 = vmatprep.subr.mxu0 %v136
    %188 = vmatpush1.msra.mxu0 %v134
    %189 = vmatprep.subr.mxu0 0.0
    %190 = vmatpush2.msra.mxu0 0.0
    %191 = vmatprep.subr.mxu0 0.0
    %192 = vmatpush2.msra.mxu0 0.0
    %193 = vmatprep.subr.mxu0 0.0
    %194 = vmatpush2.msra.mxu0 0.0
    %195 = vmatprep.subr.mxu0 0.0
    %196 = vmatpush2.msra.mxu0 0.0
    %197 = vmatprep.subr.mxu0 0.0
    %198 = vmatpush2.msra.mxu0 0.0
    %199 = vmatprep.subr.mxu0 0.0
    %200 = vmatpush2.msra.mxu0 0.0
    %201 = vmatprep.subr.mxu0 0.0
    %202 = vmatpush2.msra.mxu0 0.0
    %203 = vmatprep.subr.mxu0 0.0
    %204 = vmatpush2.msra.mxu0 0.0
    %205 = vmatprep.subr.mxu0 0.0
    %206 = vmatpush2.msra.mxu0 0.0
    %207 = vmatprep.subr.mxu0 0.0
    %208 = vmatpush2.msra.mxu0 0.0
    %209 = vmatprep.subr.mxu0 0.0
    %210 = vmatpush2.msra.mxu0 0.0
    %211 = vmatprep.subr.mxu0 0.0
    %212 = vmatpush2.msra.mxu0 0.0
    %213 = vmatprep.subr.mxu0 0.0
    %214 = vmatpush2.msra.mxu0 0.0
    %215 = vmatprep.subr.mxu0 0.0
    %216 = vmatpush2.msra.mxu0 0.0
    %217 = vmatprep.subr.mxu0 0.0
    %218 = vmatpush2.msra.mxu0 0.0
    %219 = vmatprep.subr.mxu0 0.0
    %220 = vmatpush2.msra.mxu0 0.0
    %221 = vmatprep.mubr.f32.mxu0 0.0
    %222 = vmatmul.mubr.f32.gmra.mxu0 %v146
    %v223 = vpop.f32.mrf.mxu0
    %v224 = vadd.f32 0.0, %v223
    %v225 = vpop.f32.mrf.mxu0
    %v226 = vadd.f32 0.0, %v225
    %227 = vmatprep.mubr.f32.mxu0 0.0
    %228 = vmatmul.mubr.f32.gmra.mxu0 %v149
    %v229 = vpop.f32.mrf.mxu0
    %v230 = vadd.f32 0.0, %v229
    %v231 = vpop.f32.mrf.mxu0
    %v232 = vadd.f32 0.0, %v231
    %233 = vmatprep.mubr.f32.mxu0 0.0
    %234 = vmatmul.mubr.f32.gmra.mxu0 %v152
    %v235 = vpop.f32.mrf.mxu0
    %v236 = vadd.f32 0.0, %v235
    %v237 = vpop.f32.mrf.mxu0
    %v238 = vadd.f32 0.0, %v237
    %239 = vmatprep.mubr.f32.mxu0 0.0
    %240 = vmatmul.mubr.f32.gmra.mxu0 %v155
    %v241 = vpop.f32.mrf.mxu0
    %v242 = vadd.f32 0.0, %v241
    %v243 = vpop.f32.mrf.mxu0
    %v244 = vadd.f32 0.0, %v243
    %245 = vdwg.mxu0
    %246 = vst [vmem:[#allocation5] sm:$0xff] %v224
    %247 = vst [vmem:[#allocation5 + $0x8] sm:$0xff] %v226
    %248 = vst [vmem:[#allocation5 + $0x10] sm:$0xff] %v230
    %249 = vst [vmem:[#allocation5 + $0x18] sm:$0xff] %v232
    %250 = vst [vmem:[#allocation5 + $0x20] sm:$0xff] %v236
    %251 = vst [vmem:[#allocation5 + $0x28] sm:$0xff] %v238
    %252 = vst [vmem:[#allocation5 + $0x30] sm:$0xff] %v242
    %253 = vst [vmem:[#allocation5 + $0x38] sm:$0xff] %v244
    // Predicated region
    $region18: #{tpu_custom_call.1} parent=1 // pred_check
      _
    $region19: #{tpu_custom_call.1} parent=1 // pred_check_branch
      %255 = sbr.rel (0) target = $region21
    $region20: #{tpu_custom_call.1} parent=1 // pred_region
      %s257 = ssub.s32 1024, 1024
      %258 = vsyncadd [#allocation4], %s257
      %s259 = sshll.u32 [#allocation5], 4
      %s260 = int_to_ptr.vmem [resolvable:$true] %s259
      %265 = dma.vmem_to_hbm [thread:$0]  %s260, 1024, %s3, [#allocation4], 256, 256, 16
    $region21: #{tpu_custom_call.1} parent=1 // pred_fallthru
      _
    // Predicated region
    $region22: #{tpu_custom_call.1} parent=1 // pred_check
      _
    $region23: #{tpu_custom_call.1} parent=1 // pred_check_branch
      %267 = sbr.rel (0) target = $region25
    $region24: #{tpu_custom_call.1} parent=1 // pred_region
      %268 = dma.done [#allocation4], 1024
    $region25: #{tpu_custom_call.1} parent=1 // pred_fallthru
      _
    %269 = vsyncpa [#allocation3], 1
    %270 = vsyncpa [#allocation4], 1

</llo_original>
